<compile_context>
chip_gen: v7x
topology: tpu7x:2x2x1
jax: 0.10.0
libtpu: 0.0.40
codegen_flags: <defaults>
</compile_context>

<pallas_src>
import math
import functools

import jax
import jax.numpy as jnp
from jax.experimental import pallas as pl
from jax.experimental.pallas import tpu as pltpu


# ----------------------------- VMEM / tile sizing ----------------------------------

def _vmem_limit_bytes():
    """Generation-aware scoped-VMEM limit (v5e/v6e: 128 MiB physical, v7x: 64 MiB)."""
    try:
        cap = pltpu.get_tpu_info().vmem_capacity_bytes
    except Exception:
        cap = 80 * 1024 * 1024          # conservative fallback if the query is unavailable
    # Leave headroom for double-buffering and compiler scratch.
    return max(32 * 1024 * 1024, min(int(cap * 0.6), 100 * 1024 * 1024))


def _divisor_tile(S, cap):
    if S <= cap:
        return S
    for t in (1024, 512, 256, 128, 64, 32, 16, 8):
        if t <= cap and S % t == 0:
            return t
    return S


def _pick_tiles(S, n_heads, d_head, d_model, vmem_budget):
    """Pick (q_tile, kv_tile). Prefer 512 (multiple of 256 keeps the v6e/v7x 256x256 MXU
    full; also fine on v5e's 128x128), then shrink the KV tile until the rough per-step
    working set fits the VMEM budget."""
    H = n_heads * d_head
    q_cap, kv_cap = 512, 512
    while True:
        qt = _divisor_tile(S, q_cap)
        kt = _divisor_tile(S, kv_cap)
        working = (
            2 * (qt + 2 * kt) * H * 4              # double-buffered q/k/v blocks (worst-case f32)
            + n_heads * qt * kt * 4                # score tile (f32)
            + n_heads * qt * (d_head + 2) * 4      # acc + m + l scratch
            + (H * d_model + 4 * d_model) * 4      # resident W_out + biases
            + 2 * qt * d_model * 4                 # double-buffered output block
        )
        if working <= vmem_budget or kt <= 128 or kv_cap <= 8:
            return qt, kt
        kv_cap //= 2


# ----------------------------------- kernels ---------------------------------------

def _ln_qkv_kernel(x_ref, g_ref, beta_ref, wqkv_ref, bqkv_ref,
                   q_ref, k_ref, v_ref, *, n_heads, d_head):
    """LayerNorm + fused QKV projection. Runs once per (batch, seq-tile)."""
    H = n_heads * d_head
    mxu_dtype = wqkv_ref.dtype

    # LayerNorm over last dim in f32 (biased var, eps=1e-5 like torch).
    x = x_ref[0].astype(jnp.float32)                                    # (T, D)
    mean = jnp.mean(x, axis=-1, keepdims=True)
    var = jnp.mean(jnp.square(x - mean), axis=-1, keepdims=True)
    xn = (x - mean) * jax.lax.rsqrt(var + 1e-5)
    xn = xn * g_ref[...].astype(jnp.float32) + beta_ref[...].astype(jnp.float32)

    # One wide MXU pass (N = 3H), f32 accumulation. 1/sqrt(d_head) is pre-folded into
    # the Q weight/bias columns, so no score scaling is needed downstream.
    qkv = jnp.dot(xn.astype(mxu_dtype), wqkv_ref[...],
                  preferred_element_type=jnp.float32)
    qkv = qkv + bqkv_ref[...].astype(jnp.float32)                       # (T, 3H)

    T = x_ref.shape[1]

    def head_major(block):
        # One relayout per seq-tile here, instead of per (q-tile x kv-tile) downstream.
        # TODO(synk): with d_head < 128 the head-major intermediate is lane-sparse; for
        # production configs keep d_head >= 128 or leave the head dim in place via
        # dot_general batching if the bundle dump shows costly vxpose/relayout copies.
        return block.reshape(T, n_heads, d_head).swapaxes(0, 1)         # (nh, T, dh)

    q_ref[0] = head_major(qkv[:, :H]).astype(q_ref.dtype)
    k_ref[0] = head_major(qkv[:, H:2 * H]).astype(k_ref.dtype)
    v_ref[0] = head_major(qkv[:, 2 * H:]).astype(v_ref.dtype)


def _flash_attn_kernel(q_ref, k_ref, v_ref, wo_ref, bo_ref, o_ref,
                       m_sc, l_sc, acc_sc, *, approx_softmax):
    """Head-batched online-softmax attention over KV tiles + fused output projection."""
    ki = pl.program_id(2)

    @pl.when(ki == 0)
    def _():
        m_sc[...] = jnp.full(m_sc.shape, -jnp.inf, jnp.float32)
        l_sc[...] = jnp.zeros(l_sc.shape, jnp.float32)
        acc_sc[...] = jnp.zeros(acc_sc.shape, jnp.float32)

    q = q_ref[0]                                     # (nh, TQ, dh), already 1/sqrt(dh)-scaled
    k = k_ref[0]                                     # (nh, TK, dh)
    v = v_ref[0]                                     # (nh, TK, dh)

    # Head-batched contraction on the last dims -> no k transpose feeding the MXU.
    s = jnp.einsum('hqd,hkd->hqk', q, k,
                   preferred_element_type=jnp.float32)                  # (nh, TQ, TK)

    m_prev = m_sc[...]
    m_new = jnp.maximum(m_prev, jnp.max(s, axis=-1, keepdims=True))
    alpha = jnp.exp(m_prev - m_new)
    p = jnp.exp(s - m_new)
    l_sc[...] = alpha * l_sc[...] + jnp.sum(p, axis=-1, keepdims=True)
    acc_sc[...] = alpha * acc_sc[...] + jnp.einsum(
        'hqk,hkd->hqd', p.astype(v.dtype), v, preferred_element_type=jnp.float32)
    m_sc[...] = m_new

    # dropout(att) / dropout(ctx): identity in eval mode.
    @pl.when(ki == pl.num_programs(2) - 1)
    def _():
        nh, tq, dh = acc_sc.shape
        ctx = acc_sc[...] * pl.reciprocal(l_sc[...], approx=approx_softmax)
        ctx = ctx.swapaxes(0, 1).reshape(tq, nh * dh)                   # (TQ, H)
        out = jnp.dot(ctx.astype(wo_ref.dtype), wo_ref[...],
                      preferred_element_type=jnp.float32)
        out = out + bo_ref[...].astype(jnp.float32)
        o_ref[0] = out.astype(o_ref.dtype)


# ----------------------------------- wrappers --------------------------------------

def fuse_params(params, *, d_head, mxu_dtype=jnp.bfloat16):
    """Pre-concatenate and pre-cast the fused weights ONCE (not per call); fold the
    1/sqrt(d_head) softmax scale into the Q weight/bias columns."""
    # TODO(synk): on v7x the projection weights could be fed in fp8 (f32 accumulate) for
    # ~2x MXU throughput on the matmuls; gate behind an accuracy check.
    inv_scale = 1.0 / math.sqrt(float(d_head))
    w_qkv = jnp.concatenate(
        [params["wq"] * inv_scale, params["wk"], params["wv"]], axis=1).astype(mxu_dtype)
    b_qkv = jnp.concatenate(
        [params["bq"] * inv_scale, params["bk"], params["bv"]], axis=1).astype(jnp.float32)
    return {
        "ln_g": params["ln_g"].astype(jnp.float32),
        "ln_b": params["ln_b"].astype(jnp.float32),
        "w_qkv": w_qkv,
        "b_qkv": b_qkv,
        "wo": params["wo"].astype(mxu_dtype),
        "bo": params["bo"].astype(jnp.float32),
    }


def self_attention_pallas(x, fused, *, n_heads, d_head,
                          mxu_dtype=jnp.bfloat16, q_tile=None, kv_tile=None):
    B, S, D = x.shape
    H = n_heads * d_head
    vmem_limit = _vmem_limit_bytes()
    auto_q, auto_kv = _pick_tiles(S, n_heads, d_head, D, vmem_limit)
    q_tile = auto_q if q_tile is None else q_tile
    kv_tile = auto_kv if kv_tile is None else kv_tile
    assert S % q_tile == 0 and S % kv_tile == 0
    nq, nkv = S // q_tile, S // kv_tile

    full = lambda shape: pl.BlockSpec(shape, lambda *_: (0,) * len(shape))

    def cparams(sem):
        return pltpu.CompilerParams(dimension_semantics=sem,
                                    vmem_limit_bytes=vmem_limit)

    # ---- Stage 1: LayerNorm + fused QKV projection (once per (batch, seq tile)) ----
    # TODO(synk): for production d_model/H, tile the (D, 3H) weight over K/N grid axes
    # (or stream it HBM-resident via emit_pipeline) instead of a full-array BlockSpec.
    qkv_shape = jax.ShapeDtypeStruct((B, n_heads, S, d_head), mxu_dtype)
    hm_spec = pl.BlockSpec((1, n_heads, q_tile, d_head), lambda b, si: (b, 0, si, 0))
    q, k, v = pl.pallas_call(
        functools.partial(_ln_qkv_kernel, n_heads=n_heads, d_head=d_head),
        out_shape=(qkv_shape, qkv_shape, qkv_shape),
        grid_spec=pltpu.PrefetchScalarGridSpec(
            num_scalar_prefetch=0,
            grid=(B, nq),
            in_specs=[
                pl.BlockSpec((1, q_tile, D), lambda b, si: (b, si, 0)),   # x tile
                full((1, D)),            # LN gamma
                full((1, D)),            # LN beta
                full((D, 3 * H)),        # fused W_qkv (Q columns pre-scaled)
                full((1, 3 * H)),        # fused b_qkv
            ],
            out_specs=[hm_spec, hm_spec, hm_spec],
        ),
        compiler_params=cparams(("parallel", "parallel")),
    )(x, fused["ln_g"], fused["ln_b"], fused["w_qkv"], fused["b_qkv"])

    # ---- Stage 2: flash attention over KV tiles + fused output projection ----
    out = pl.pallas_call(
        functools.partial(_flash_attn_kernel,
                          approx_softmax=(mxu_dtype != jnp.float32)),
        out_shape=jax.ShapeDtypeStruct((B, S, D), x.dtype),
        grid_spec=pltpu.PrefetchScalarGridSpec(
            num_scalar_prefetch=0,
            grid=(B, nq, nkv),
            in_specs=[
                pl.BlockSpec((1, n_heads, q_tile, d_head),
                             lambda b, qi, ki: (b, 0, qi, 0)),            # Q tile
                pl.BlockSpec((1, n_heads, kv_tile, d_head),
                             lambda b, qi, ki: (b, 0, ki, 0)),            # K tile
                pl.BlockSpec((1, n_heads, kv_tile, d_head),
                             lambda b, qi, ki: (b, 0, ki, 0)),            # V tile
                full((H, D)),            # W_out
                full((1, D)),            # b_out
            ],
            out_specs=pl.BlockSpec((1, q_tile, D), lambda b, qi, ki: (b, qi, 0)),
            scratch_shapes=[
                pltpu.VMEM((n_heads, q_tile, 1), jnp.float32),            # running max m
                pltpu.VMEM((n_heads, q_tile, 1), jnp.float32),            # running sum l
                pltpu.VMEM((n_heads, q_tile, d_head), jnp.float32),       # acc
            ],
        ),
        compiler_params=cparams(("parallel", "parallel", "arbitrary")),
    )(q, k, v, fused["wo"], fused["bo"])
    return out


# --------------------------------- reference / init --------------------------------

def self_attention_ref(x, params, *, n_heads, d_head):
    """Pure-JAX reference mirroring the PyTorch forward (dropout = eval)."""
    xf = x.astype(jnp.float32)
    mean = jnp.mean(xf, axis=-1, keepdims=True)
    var = jnp.mean((xf - mean) ** 2, axis=-1, keepdims=True)
    xn = (xf - mean) / jnp.sqrt(var + 1e-5) * params["ln_g"][0] + params["ln_b"][0]

    b, s, _ = x.shape
    q = (xn @ params["wq"] + params["bq"][0]).reshape(b, s, n_heads, d_head)
    k = (xn @ params["wk"] + params["bk"][0]).reshape(b, s, n_heads, d_head)
    v = (xn @ params["wv"] + params["bv"][0]).reshape(b, s, n_heads, d_head)
    scores = jnp.einsum('bihd,bjhd->bhij', q, k) / jnp.sqrt(jnp.float32(d_head))
    att = jax.nn.softmax(scores, axis=-1)
    out = jnp.einsum('bhij,bjhd->bihd', att, v).reshape(b, s, n_heads * d_head)
    return (out @ params["wo"] + params["bo"][0]).astype(x.dtype)


def init_params(key, d_model, n_heads, d_head):
    H = n_heads * d_head
    ks = jax.random.split(key, 8)
    scale_in = 1.0 / math.sqrt(d_model)
    scale_h = 1.0 / math.sqrt(H)
    return {
        "ln_g": jnp.ones((1, d_model), jnp.float32),
        "ln_b": jnp.zeros((1, d_model), jnp.float32),
        "wq": jax.random.uniform(ks[0], (d_model, H), jnp.float32, -scale_in, scale_in),
        "bq": jax.random.uniform(ks[1], (1, H), jnp.float32, -scale_in, scale_in),
        "wk": jax.random.uniform(ks[2], (d_model, H), jnp.float32, -scale_in, scale_in),
        "bk": jax.random.uniform(ks[3], (1, H), jnp.float32, -scale_in, scale_in),
        "wv": jax.random.uniform(ks[4], (d_model, H), jnp.float32, -scale_in, scale_in),
        "bv": jax.random.uniform(ks[5], (1, H), jnp.float32, -scale_in, scale_in),
        "wo": jax.random.uniform(ks[6], (H, d_model), jnp.float32, -scale_h, scale_h),
        "bo": jax.random.uniform(ks[7], (1, d_model), jnp.float32, -scale_h, scale_h),
    }


if __name__ == "__main__":
    B, S, d_model = 2, 8, 32
    n_heads, d_head = 2, 16

    key = jax.random.PRNGKey(0)
    kx, kp = jax.random.split(key)
    x = jax.random.normal(kx, (B, S, d_model), jnp.float32)
    params = init_params(kp, d_model, n_heads, d_head)

    ref = self_attention_ref(x, params, n_heads=n_heads, d_head=d_head)

    # Strict path: f32 MXU feeds + exact reciprocal — must match the f32 reference tightly.
    fused_f32 = fuse_params(params, d_head=d_head, mxu_dtype=jnp.float32)
    out_f32 = jax.block_until_ready(
        self_attention_pallas(x, fused_f32, n_heads=n_heads, d_head=d_head,
                              mxu_dtype=jnp.float32))
    assert out_f32.shape == (B, S, d_model)
    assert jnp.allclose(out_f32, ref, atol=1e-4, rtol=1e-4), "f32 path mismatch vs reference"

    # Fast path: bf16 MXU feeds + approx softmax reciprocal (LN/softmax math stays f32).
    fused_bf16 = fuse_params(params, d_head=d_head, mxu_dtype=jnp.bfloat16)
    out_bf16 = jax.block_until_ready(
        self_attention_pallas(x, fused_bf16, n_heads=n_heads, d_head=d_head,
                              mxu_dtype=jnp.bfloat16))
    assert out_bf16.shape == (B, S, d_model)
    assert jnp.allclose(out_bf16, ref, atol=5e-2, rtol=5e-2), "bf16 path mismatch vs reference"

    print("KERNEL_OK")
</pallas_src>

<mosaic_0001>
module attributes {stable_mosaic.version = 11 : i64} {
  func.func @_ln_qkv_kernel(%arg0: i32, %arg1: i32, %arg2: memref<1x8x32xf32, #tpu.memory_space<vmem>>, %arg3: memref<1x32xf32, #tpu.memory_space<vmem>>, %arg4: memref<1x32xf32, #tpu.memory_space<vmem>>, %arg5: memref<32x96xf32, #tpu.memory_space<vmem>>, %arg6: memref<1x96xf32, #tpu.memory_space<vmem>>, %arg7: memref<1x2x8x16xf32, #tpu.memory_space<vmem>>, %arg8: memref<1x2x8x16xf32, #tpu.memory_space<vmem>>, %arg9: memref<1x2x8x16xf32, #tpu.memory_space<vmem>>) attributes {dimension_semantics = [#tpu.dimension_semantics<parallel>, #tpu.dimension_semantics<parallel>], iteration_bounds = array<i64: 2, 1>, scalar_prefetch = 0 : i64, scratch_operands = 0 : i64, tpu.core_type = #tpu.core_type<tc>, window_params = [{transform_indices = @transform_0, window_bounds = array<i64: 1, 8, 32>}, {pipeline_mode = #tpu.pipeline_mode<synchronous>, transform_indices = @transform_1, window_bounds = array<i64: 1, 32>}, {pipeline_mode = #tpu.pipeline_mode<synchronous>, transform_indices = @transform_2, window_bounds = array<i64: 1, 32>}, {pipeline_mode = #tpu.pipeline_mode<synchronous>, transform_indices = @transform_3, window_bounds = array<i64: 32, 96>}, {pipeline_mode = #tpu.pipeline_mode<synchronous>, transform_indices = @transform_4, window_bounds = array<i64: 1, 96>}, {transform_indices = @transform_5, window_bounds = array<i64: 1, 2, 8, 16>}, {transform_indices = @transform_6, window_bounds = array<i64: 1, 2, 8, 16>}, {transform_indices = @transform_7, window_bounds = array<i64: 1, 2, 8, 16>}]} {
    %c0 = arith.constant 0 : index
    %c0_0 = arith.constant 0 : index
    %c0_1 = arith.constant 0 : index
    %0 = vector.load %arg2[%c0, %c0_0, %c0_1] : memref<1x8x32xf32, #tpu.memory_space<vmem>>, vector<1x8x32xf32>
    %1 = vector.shape_cast %0 : vector<1x8x32xf32> to vector<8x32xf32>
    %cst = arith.constant dense<0.000000e+00> : vector<8xf32>
    %2 = vector.multi_reduction <add>, %1, %cst [1] : vector<8x32xf32> to vector<8xf32>
    %3 = vector.shape_cast %2 : vector<8xf32> to vector<8x1xf32>
    %cst_2 = arith.constant 3.200000e+01 : f32
    %4 = vector.broadcast %cst_2 : f32 to vector<8x1xf32>
    %5 = arith.divf %3, %4 : vector<8x1xf32>
    %6 = vector.broadcast %5 : vector<8x1xf32> to vector<8x32xf32>
    %7 = arith.subf %1, %6 : vector<8x32xf32>
    %8 = arith.mulf %7, %7 : vector<8x32xf32>
    %cst_3 = arith.constant dense<0.000000e+00> : vector<8xf32>
    %9 = vector.multi_reduction <add>, %8, %cst_3 [1] : vector<8x32xf32> to vector<8xf32>
    %10 = vector.shape_cast %9 : vector<8xf32> to vector<8x1xf32>
    %cst_4 = arith.constant 3.200000e+01 : f32
    %11 = vector.broadcast %cst_4 : f32 to vector<8x1xf32>
    %12 = arith.divf %10, %11 : vector<8x1xf32>
    %13 = vector.broadcast %5 : vector<8x1xf32> to vector<8x32xf32>
    %14 = arith.subf %1, %13 : vector<8x32xf32>
    %cst_5 = arith.constant 9.99999974E-6 : f32
    %15 = vector.broadcast %cst_5 : f32 to vector<8x1xf32>
    %16 = arith.addf %12, %15 : vector<8x1xf32>
    %17 = math.rsqrt %16 : vector<8x1xf32>
    %18 = vector.broadcast %17 : vector<8x1xf32> to vector<8x32xf32>
    %19 = arith.mulf %14, %18 : vector<8x32xf32>
    %c0_6 = arith.constant 0 : index
    %c0_7 = arith.constant 0 : index
    %20 = vector.load %arg3[%c0_6, %c0_7] : memref<1x32xf32, #tpu.memory_space<vmem>>, vector<1x32xf32>
    %21 = vector.broadcast %20 : vector<1x32xf32> to vector<8x32xf32>
    %22 = arith.mulf %19, %21 : vector<8x32xf32>
    %c0_8 = arith.constant 0 : index
    %c0_9 = arith.constant 0 : index
    %23 = vector.load %arg4[%c0_8, %c0_9] : memref<1x32xf32, #tpu.memory_space<vmem>>, vector<1x32xf32>
    %24 = vector.broadcast %23 : vector<1x32xf32> to vector<8x32xf32>
    %25 = arith.addf %22, %24 : vector<8x32xf32>
    %c0_10 = arith.constant 0 : index
    %c0_11 = arith.constant 0 : index
    %26 = vector.load %arg5[%c0_10, %c0_11] : memref<32x96xf32, #tpu.memory_space<vmem>>, vector<32x96xf32>
    %cst_12 = arith.constant dense<0.000000e+00> : vector<8x96xf32>
    %27 = tpu.matmul %25, %26, %cst_12 {dimension_numbers = #tpu.dot_dimension_numbers<[1], [0], [0], [1], [0, 0, 1, 1], [], []>} : vector<8x32xf32>, vector<32x96xf32>, vector<8x96xf32> -> vector<8x96xf32>
    %c0_13 = arith.constant 0 : index
    %c0_14 = arith.constant 0 : index
    %28 = vector.load %arg6[%c0_13, %c0_14] : memref<1x96xf32, #tpu.memory_space<vmem>>, vector<1x96xf32>
    %29 = vector.broadcast %28 : vector<1x96xf32> to vector<8x96xf32>
    %30 = arith.addf %27, %29 : vector<8x96xf32>
    %31 = vector.extract_strided_slice %30 {offsets = [0, 0], sizes = [8, 32], strides = [1, 1]} : vector<8x96xf32> to vector<8x32xf32>
    %32 = vector.shape_cast %31 : vector<8x32xf32> to vector<8x2x16xf32>
    %33 = tpu.transpose %32, [1, 0, 2] : vector<8x2x16xf32> -> vector<2x8x16xf32>
    %c0_15 = arith.constant 0 : index
    %c0_16 = arith.constant 0 : index
    %c0_17 = arith.constant 0 : index
    %c0_18 = arith.constant 0 : index
    %34 = vector.load %arg7[%c0_15, %c0_16, %c0_17, %c0_18] : memref<1x2x8x16xf32, #tpu.memory_space<vmem>>, vector<1x2x8x16xf32>
    %35 = vector.shape_cast %34 : vector<1x2x8x16xf32> to vector<2x8x16xf32>
    %36 = vector.shape_cast %33 : vector<2x8x16xf32> to vector<1x2x8x16xf32>
    tpu.vector_store %arg7[%c0_15, %c0_16, %c0_17, %c0_18], %36 {strides = array<i32>} : memref<1x2x8x16xf32, #tpu.memory_space<vmem>>, vector<1x2x8x16xf32>,
    %37 = vector.extract_strided_slice %30 {offsets = [0, 32], sizes = [8, 32], strides = [1, 1]} : vector<8x96xf32> to vector<8x32xf32>
    %38 = vector.shape_cast %37 : vector<8x32xf32> to vector<8x2x16xf32>
    %39 = tpu.transpose %38, [1, 0, 2] : vector<8x2x16xf32> -> vector<2x8x16xf32>
    %c0_19 = arith.constant 0 : index
    %c0_20 = arith.constant 0 : index
    %c0_21 = arith.constant 0 : index
    %c0_22 = arith.constant 0 : index
    %40 = vector.load %arg8[%c0_19, %c0_20, %c0_21, %c0_22] : memref<1x2x8x16xf32, #tpu.memory_space<vmem>>, vector<1x2x8x16xf32>
    %41 = vector.shape_cast %40 : vector<1x2x8x16xf32> to vector<2x8x16xf32>
    %42 = vector.shape_cast %39 : vector<2x8x16xf32> to vector<1x2x8x16xf32>
    tpu.vector_store %arg8[%c0_19, %c0_20, %c0_21, %c0_22], %42 {strides = array<i32>} : memref<1x2x8x16xf32, #tpu.memory_space<vmem>>, vector<1x2x8x16xf32>,
    %43 = vector.extract_strided_slice %30 {offsets = [0, 64], sizes = [8, 32], strides = [1, 1]} : vector<8x96xf32> to vector<8x32xf32>
    %44 = vector.shape_cast %43 : vector<8x32xf32> to vector<8x2x16xf32>
    %45 = tpu.transpose %44, [1, 0, 2] : vector<8x2x16xf32> -> vector<2x8x16xf32>
    %c0_23 = arith.constant 0 : index
    %c0_24 = arith.constant 0 : index
    %c0_25 = arith.constant 0 : index
    %c0_26 = arith.constant 0 : index
    %46 = vector.load %arg9[%c0_23, %c0_24, %c0_25, %c0_26] : memref<1x2x8x16xf32, #tpu.memory_space<vmem>>, vector<1x2x8x16xf32>
    %47 = vector.shape_cast %46 : vector<1x2x8x16xf32> to vector<2x8x16xf32>
    %48 = vector.shape_cast %45 : vector<2x8x16xf32> to vector<1x2x8x16xf32>
    tpu.vector_store %arg9[%c0_23, %c0_24, %c0_25, %c0_26], %48 {strides = array<i32>} : memref<1x2x8x16xf32, #tpu.memory_space<vmem>>, vector<1x2x8x16xf32>,
    return
  }
  func.func @transform_0(%arg0: i32, %arg1: i32) -> (i32, i32, i32) {
    %c0_i32 = arith.constant 0 : i32
    %c0_i32_0 = arith.constant 0 : i32
    return %arg0, %arg1, %c0_i32 : i32, i32, i32
  }
  func.func @transform_1(%arg0: i32, %arg1: i32) -> (i32, i32) {
    %c0_i32 = arith.constant 0 : i32
    %c0_i32_0 = arith.constant 0 : i32
    %c0_i32_1 = arith.constant 0 : i32
    return %c0_i32, %c0_i32_0 : i32, i32
  }
  func.func @transform_2(%arg0: i32, %arg1: i32) -> (i32, i32) {
    %c0_i32 = arith.constant 0 : i32
    %c0_i32_0 = arith.constant 0 : i32
    %c0_i32_1 = arith.constant 0 : i32
    return %c0_i32, %c0_i32_0 : i32, i32
  }
  func.func @transform_3(%arg0: i32, %arg1: i32) -> (i32, i32) {
    %c0_i32 = arith.constant 0 : i32
    %c0_i32_0 = arith.constant 0 : i32
    %c0_i32_1 = arith.constant 0 : i32
    return %c0_i32, %c0_i32_0 : i32, i32
  }
  func.func @transform_4(%arg0: i32, %arg1: i32) -> (i32, i32) {
    %c0_i32 = arith.constant 0 : i32
    %c0_i32_0 = arith.constant 0 : i32
    %c0_i32_1 = arith.constant 0 : i32
    return %c0_i32, %c0_i32_0 : i32, i32
  }
  func.func @transform_5(%arg0: i32, %arg1: i32) -> (i32, i32, i32, i32) {
    %c0_i32 = arith.constant 0 : i32
    %c0_i32_0 = arith.constant 0 : i32
    %c0_i32_1 = arith.constant 0 : i32
    return %arg0, %c0_i32, %arg1, %c0_i32_0 : i32, i32, i32, i32
  }
  func.func @transform_6(%arg0: i32, %arg1: i32) -> (i32, i32, i32, i32) {
    %c0_i32 = arith.constant 0 : i32
    %c0_i32_0 = arith.constant 0 : i32
    %c0_i32_1 = arith.constant 0 : i32
    return %arg0, %c0_i32, %arg1, %c0_i32_0 : i32, i32, i32, i32
  }
  func.func @transform_7(%arg0: i32, %arg1: i32) -> (i32, i32, i32, i32) {
    %c0_i32 = arith.constant 0 : i32
    %c0_i32_0 = arith.constant 0 : i32
    %c0_i32_1 = arith.constant 0 : i32
    return %arg0, %c0_i32, %arg1, %c0_i32_0 : i32, i32, i32, i32
  }
}

</mosaic_0001>

<llo_original>
// kernel: tpu_custom_call.1
$region0: #{tpu_custom_call.1}
  #allocation0 [shape = 'u32[]', space=smem, size = 0x4, offset = 0x4, fixed_abs, tag = 'smem constant byte address 0x4 - core index']
  #allocation1 [shape = 'u32[144,128]{1,0:T(1,128)}', space=vmem, size = 0x12000, scoped, tag = 'internal scratch']
  %s0 = inlined_call_operand.hbm [shape: f32[2,8,32], index: 0, kind: input, shape index: {}]
  %s1 = inlined_call_operand.vmem [shape: f32[1,32], index: 1, kind: input, shape index: {}]
  %s2 = inlined_call_operand.vmem [shape: f32[1,32], index: 2, kind: input, shape index: {}]
  %s3 = inlined_call_operand.hbm [shape: f32[32,96], index: 3, kind: input, shape index: {}]
  %s4 = inlined_call_operand.vmem [shape: f32[1,96], index: 4, kind: input, shape index: {}]
  %s5 = inlined_call_operand.hbm [shape: f32[2,2,8,16], index: 5, kind: output, shape index: {0}]
  %s6 = inlined_call_operand.hbm [shape: f32[2,2,8,16], index: 6, kind: output, shape index: {1}]
  %s7 = inlined_call_operand.hbm [shape: f32[2,2,8,16], index: 7, kind: output, shape index: {2}]
  %8 = xla_tuple %s5, %s6, %s7
  %s9 = sld [smem:[#allocation0]]
  $region77: #{tpu_custom_call.1} parent=0
    _
  %s11 = ssub.s32 1, %s9
  %s12 = scalar_select 0, %s11, %s9
  $region1: #{tpu_custom_call.1} parent=0
    #allocation2 [shape = 'u8[8192]{0}', space=vmem, size = 0x2000, scoped, tag = 'input window, operand 0']
    #allocation3 [shape = 's32[2]{0}', space=sflag, size = 0x8, scoped, tag = 'scoped memory for tpu_custom_call.1']
    #allocation4 [shape = 's32[2]{0}', space=sflag, size = 0x8, scoped, tag = 'scoped memory for tpu_custom_call.1']
    #allocation5 [shape = 'u8[16384]{0}', space=vmem, size = 0x4000, scoped, tag = 'input window, operand 3, single buffered']
    #allocation6 [shape = 's32[1]{0}', space=sflag, size = 0x4, scoped, tag = 'scoped memory for tpu_custom_call.1']
    #allocation7 [shape = 'u8[16384]{0}', space=vmem, size = 0x4000, scoped, tag = 'output window, operand 0']
    #allocation8 [shape = 'u8[16384]{0}', space=vmem, size = 0x4000, scoped, tag = 'output window, operand 1']
    #allocation9 [shape = 's32[2]{0}', space=sflag, size = 0x8, scoped, tag = 'scoped memory for tpu_custom_call.1']
    #allocation10 [shape = 'u8[16384]{0}', space=vmem, size = 0x4000, scoped, tag = 'output window, operand 2']
    %13 = vsyncpa [#allocation3], 0
    %s14 = scalar_lea.sflag [#allocation3], 1
    %15 = vsyncpa %s14, 0
    %16 = vsyncpa [#allocation6], 0
    %17 = vsyncpa [#allocation4], 0
    %s18 = scalar_lea.sflag [#allocation4], 1
    %19 = vsyncpa %s18, 0
    %20 = vsyncpa [#allocation9], 0
    %s21 = scalar_lea.sflag [#allocation9], 1
    %22 = vsyncpa %s21, 0
    loop: start=0, step=1, limit=4
    $region2: #{tpu_custom_call.1} parent=1 // loop_pre_header
      _
    $region3: #{tpu_custom_call.1} parent=1 // loop_header
      %s24 = sphi 0, %s28
      %p25 = scmp.ge.s32.totalorder %s24, 4
      %s31 = sphi 0, %s43
      %s32 = sphi 0, %s39
      %s33 = sphi 0, %s31
      %s34 = sphi 0, %s32
      %s35 = sphi 0, %s33
      %s36 = sphi 0, %s34
      %s48 = sphi 0, %s50
      %s51 = sphi 0, %s48
      %s52 = sphi 0, %s51
      %s68 = sphi 0, %s52
      %s72 = sphi 0, %s72
      %s74 = sphi 0, %s72
      %s75 = sphi 0, %s74
      %s89 = sphi 0, %s75
      %s93 = sphi 0, %s93
      %s95 = sphi 0, %s93
      %s96 = sphi 0, %s95
      %s110 = sphi 0, %s96
      %s114 = sphi 0, %s114
      %s116 = sphi 0, %s114
      %s117 = sphi 0, %s116
      %s131 = sphi 0, %s117
      %s135 = sphi 0, %s135
      %s137 = sphi 0, %s135
      %s138 = sphi 0, %s137
      %s152 = sphi 0, %s138
      %s160 = sphi 0, %s162
      %s163 = sphi 0, %s160
      %s164 = sphi 0, %s163
      %s180 = sphi 0, %s164
      %s188 = sphi 0, %s190
      %s191 = sphi 0, %s188
      %s192 = sphi 0, %s191
      %s208 = sphi 0, %s192
      %s216 = sphi 0, %s218
      %s219 = sphi 0, %s216
      %s220 = sphi 0, %s219
      %s236 = sphi 0, %s220
    $region4: #{tpu_custom_call.1} parent=1 // loop_header_branch
      %27 = sbr.rel (%p25) target = $region8
    $region5: #{tpu_custom_call.1} parent=1 // loop_body
      %s29 = ssub.s32 %s24, 1
      %s30 = ssub.s32 %s24, 2
      %s37 = sadd.s32 1, %s32
      %p38 = scmp.ge.s32.totalorder %s37, 1
      %s39 = scalar_select %p38, 0, %s37
      %s40 = sadd.s32 1, %s31
      %s41 = scalar_select %p38, %s40, %s31
      %p42 = scmp.ge.s32.totalorder %s41, 2
      %s43 = scalar_select %p42, 0, %s41
      %s44 = ssub.s32 %s31, %s43
      %s45 = ssub.s32 %s32, %s39
      %s46 = sor.u32 %s44, %s45
      %p47 = scmp.eq.s32.totalorder %s46, 0
      %s49 = sadd.s32 %s48, 1
      %s50 = scalar_select %p47, %s48, %s49
      %p53 = pneg %p47
      %p54 = scmp.eq.s32.totalorder %s24, 1
      %p55 = por %p53, %p54
      %p56 = scmp.ne.s32.totalorder %s48, %s51
      %p57 = scmp.eq.s32.totalorder %s24, 0
      %p58 = por %p56, %p57
      %p59 = scmp.ne.s32.totalorder %s48, %s51
      %p60 = scmp.eq.s32.totalorder %s29, 1
      %p61 = por %p59, %p60
      %p62 = scmp.ne.s32.totalorder %s51, %s52
      %p63 = scmp.eq.s32.totalorder %s29, 0
      %p64 = por %p62, %p63
      %p65 = scmp.ne.s32.totalorder %s51, %s52
      %p66 = scmp.eq.s32.totalorder %s30, 1
      %p67 = por %p65, %p66
      %p69 = scmp.ne.s32.totalorder %s52, %s68
      %p70 = scmp.eq.s32.totalorder %s30, 0
      %p71 = por %p69, %p70
      %s73 = sadd.s32 %s72, 1
      %p76 = scmp.eq.s32.totalorder %s24, 1
      %p77 = scmp.ne.s32.totalorder %s72, %s74
      %p78 = scmp.eq.s32.totalorder %s24, 0
      %p79 = por %p77, %p78
      %p80 = scmp.ne.s32.totalorder %s72, %s74
      %p81 = scmp.eq.s32.totalorder %s29, 1
      %p82 = por %p80, %p81
      %p83 = scmp.ne.s32.totalorder %s74, %s75
      %p84 = scmp.eq.s32.totalorder %s29, 0
      %p85 = por %p83, %p84
      %p86 = scmp.ne.s32.totalorder %s74, %s75
      %p87 = scmp.eq.s32.totalorder %s30, 1
      %p88 = por %p86, %p87
      %p90 = scmp.ne.s32.totalorder %s75, %s89
      %p91 = scmp.eq.s32.totalorder %s30, 0
      %p92 = por %p90, %p91
      %s94 = sadd.s32 %s93, 1
      %p97 = scmp.eq.s32.totalorder %s24, 1
      %p98 = scmp.ne.s32.totalorder %s93, %s95
      %p99 = scmp.eq.s32.totalorder %s24, 0
      %p100 = por %p98, %p99
      %p101 = scmp.ne.s32.totalorder %s93, %s95
      %p102 = scmp.eq.s32.totalorder %s29, 1
      %p103 = por %p101, %p102
      %p104 = scmp.ne.s32.totalorder %s95, %s96
      %p105 = scmp.eq.s32.totalorder %s29, 0
      %p106 = por %p104, %p105
      %p107 = scmp.ne.s32.totalorder %s95, %s96
      %p108 = scmp.eq.s32.totalorder %s30, 1
      %p109 = por %p107, %p108
      %p111 = scmp.ne.s32.totalorder %s96, %s110
      %p112 = scmp.eq.s32.totalorder %s30, 0
      %p113 = por %p111, %p112
      %s115 = sadd.s32 %s114, 1
      %p118 = scmp.eq.s32.totalorder %s24, 1
      %p119 = scmp.ne.s32.totalorder %s114, %s116
      %p120 = scmp.eq.s32.totalorder %s24, 0
      %p121 = por %p119, %p120
      %p122 = scmp.ne.s32.totalorder %s114, %s116
      %p123 = scmp.eq.s32.totalorder %s29, 1
      %p124 = por %p122, %p123
      %p125 = scmp.ne.s32.totalorder %s116, %s117
      %p126 = scmp.eq.s32.totalorder %s29, 0
      %p127 = por %p125, %p126
      %p128 = scmp.ne.s32.totalorder %s116, %s117
      %p129 = scmp.eq.s32.totalorder %s30, 1
      %p130 = por %p128, %p129
      %p132 = scmp.ne.s32.totalorder %s117, %s131
      %p133 = scmp.eq.s32.totalorder %s30, 0
      %p134 = por %p132, %p133
      %s136 = sadd.s32 %s135, 1
      %p139 = scmp.eq.s32.totalorder %s24, 1
      %p140 = scmp.ne.s32.totalorder %s135, %s137
      %p141 = scmp.eq.s32.totalorder %s24, 0
      %p142 = por %p140, %p141
      %p143 = scmp.ne.s32.totalorder %s135, %s137
      %p144 = scmp.eq.s32.totalorder %s29, 1
      %p145 = por %p143, %p144
      %p146 = scmp.ne.s32.totalorder %s137, %s138
      %p147 = scmp.eq.s32.totalorder %s29, 0
      %p148 = por %p146, %p147
      %p149 = scmp.ne.s32.totalorder %s137, %s138
      %p150 = scmp.eq.s32.totalorder %s30, 1
      %p151 = por %p149, %p150
      %p153 = scmp.ne.s32.totalorder %s138, %s152
      %p154 = scmp.eq.s32.totalorder %s30, 0
      %p155 = por %p153, %p154
      %s156 = ssub.s32 %s31, %s43
      %s157 = ssub.s32 %s32, %s39
      %s158 = sor.u32 %s156, %s157
      %p159 = scmp.eq.s32.totalorder %s158, 0
      %s161 = sadd.s32 %s160, 1
      %s162 = scalar_select %p159, %s160, %s161
      %p165 = pneg %p159
      %p166 = scmp.eq.s32.totalorder %s24, 1
      %p167 = por %p165, %p166
      %p168 = scmp.ne.s32.totalorder %s160, %s163
      %p169 = scmp.eq.s32.totalorder %s24, 0
      %p170 = por %p168, %p169
      %p171 = scmp.ne.s32.totalorder %s160, %s163
      %p172 = scmp.eq.s32.totalorder %s29, 1
      %p173 = por %p171, %p172
      %p174 = scmp.ne.s32.totalorder %s163, %s164
      %p175 = scmp.eq.s32.totalorder %s29, 0
      %p176 = por %p174, %p175
      %p177 = scmp.ne.s32.totalorder %s163, %s164
      %p178 = scmp.eq.s32.totalorder %s30, 1
      %p179 = por %p177, %p178
      %p181 = scmp.ne.s32.totalorder %s164, %s180
      %p182 = scmp.eq.s32.totalorder %s30, 0
      %p183 = por %p181, %p182
      %s184 = ssub.s32 %s31, %s43
      %s185 = ssub.s32 %s32, %s39
      %s186 = sor.u32 %s184, %s185
      %p187 = scmp.eq.s32.totalorder %s186, 0
      %s189 = sadd.s32 %s188, 1
      %s190 = scalar_select %p187, %s188, %s189
      %p193 = pneg %p187
      %p194 = scmp.eq.s32.totalorder %s24, 1
      %p195 = por %p193, %p194
      %p196 = scmp.ne.s32.totalorder %s188, %s191
      %p197 = scmp.eq.s32.totalorder %s24, 0
      %p198 = por %p196, %p197
      %p199 = scmp.ne.s32.totalorder %s188, %s191
      %p200 = scmp.eq.s32.totalorder %s29, 1
      %p201 = por %p199, %p200
      %p202 = scmp.ne.s32.totalorder %s191, %s192
      %p203 = scmp.eq.s32.totalorder %s29, 0
      %p204 = por %p202, %p203
      %p205 = scmp.ne.s32.totalorder %s191, %s192
      %p206 = scmp.eq.s32.totalorder %s30, 1
      %p207 = por %p205, %p206
      %p209 = scmp.ne.s32.totalorder %s192, %s208
      %p210 = scmp.eq.s32.totalorder %s30, 0
      %p211 = por %p209, %p210
      %s212 = ssub.s32 %s31, %s43
      %s213 = ssub.s32 %s32, %s39
      %s214 = sor.u32 %s212, %s213
      %p215 = scmp.eq.s32.totalorder %s214, 0
      %s217 = sadd.s32 %s216, 1
      %s218 = scalar_select %p215, %s216, %s217
      %p221 = pneg %p215
      %p222 = scmp.eq.s32.totalorder %s24, 1
      %p223 = por %p221, %p222
      %p224 = scmp.ne.s32.totalorder %s216, %s219
      %p225 = scmp.eq.s32.totalorder %s24, 0
      %p226 = por %p224, %p225
      %p227 = scmp.ne.s32.totalorder %s216, %s219
      %p228 = scmp.eq.s32.totalorder %s29, 1
      %p229 = por %p227, %p228
      %p230 = scmp.ne.s32.totalorder %s219, %s220
      %p231 = scmp.eq.s32.totalorder %s29, 0
      %p232 = por %p230, %p231
      %p233 = scmp.ne.s32.totalorder %s219, %s220
      %p234 = scmp.eq.s32.totalorder %s30, 1
      %p235 = por %p233, %p234
      %p237 = scmp.ne.s32.totalorder %s220, %s236
      %p238 = scmp.eq.s32.totalorder %s30, 0
      %p239 = por %p237, %p238
      %p240 = scmp.le.s32.totalorder 1, %s24
      %p241 = scmp.lt.s32.totalorder %s24, 3
      %p242 = pnand %p240, %p241
      %p243 = pneg %p242
      // Predicated region
      $region9: #{tpu_custom_call.1} parent=5 // pred_check
        _
      $region10: #{tpu_custom_call.1} parent=5 // pred_check_branch
        %245 = sbr.rel (%p242) target = $region12
      $region11: #{tpu_custom_call.1} parent=5 // pred_region
        %s246 = ssub.s32 %s24, 1
        // Predicated region
        $region13: #{tpu_custom_call.1} parent=11 // pred_check
          %p247 = pneg %p85
        $region14: #{tpu_custom_call.1} parent=11 // pred_check_branch
          %249 = sbr.rel (%p247) target = $region16
        $region15: #{tpu_custom_call.1} parent=11 // pred_region
          _
        $region16: #{tpu_custom_call.1} parent=11 // pred_fallthru
          _
        // Predicated region
        $region17: #{tpu_custom_call.1} parent=11 // pred_check
          %p250 = pneg %p106
        $region18: #{tpu_custom_call.1} parent=11 // pred_check_branch
          %252 = sbr.rel (%p250) target = $region20
        $region19: #{tpu_custom_call.1} parent=11 // pred_region
          _
        $region20: #{tpu_custom_call.1} parent=11 // pred_fallthru
          _
        // Predicated region
        $region21: #{tpu_custom_call.1} parent=11 // pred_check
          %p253 = pneg %p127
        $region22: #{tpu_custom_call.1} parent=11 // pred_check_branch
          %255 = sbr.rel (%p253) target = $region24
        $region23: #{tpu_custom_call.1} parent=11 // pred_region
          %s257 = ssub.s32 512, 512
          %258 = vsyncadd [#allocation6], %s257
          %s259 = sshll.u32 [#allocation5], 4
          %s260 = int_to_ptr.vmem [resolvable:$true] %s259
          %265 = dma.hbm_to_vmem [thread:$0]  %s3, 512, %s260, [#allocation6], 128, 128, 8
        $region24: #{tpu_custom_call.1} parent=11 // pred_fallthru
          _
        // Predicated region
        $region25: #{tpu_custom_call.1} parent=11 // pred_check
          %p266 = pneg %p148
        $region26: #{tpu_custom_call.1} parent=11 // pred_check_branch
          %268 = sbr.rel (%p266) target = $region28
        $region27: #{tpu_custom_call.1} parent=11 // pred_region
          _
        $region28: #{tpu_custom_call.1} parent=11 // pred_fallthru
          _
      $region12: #{tpu_custom_call.1} parent=5 // pred_fallthru
        _
      %p269 = scmp.lt.s32.totalorder %s24, 2
      // Predicated region
      $region29: #{tpu_custom_call.1} parent=5 // pred_check
        %p270 = pneg %p269
      $region30: #{tpu_custom_call.1} parent=5 // pred_check_branch
        %272 = sbr.rel (%p270) target = $region32
      $region31: #{tpu_custom_call.1} parent=5 // pred_region
        // Predicated region
        $region33: #{tpu_custom_call.1} parent=31 // pred_check
          %p273 = pneg %p58
        $region34: #{tpu_custom_call.1} parent=31 // pred_check_branch
          %275 = sbr.rel (%p273) target = $region36
        $region35: #{tpu_custom_call.1} parent=31 // pred_region
          %s276 = sand.u32 %s48, 1
          %s277 = scalar_lea.sflag [#allocation3], %s276
          %s278 = sand.u32 %s48, 1
          %s279 = smul.addr %s278, 8
          %s280 = scalar_lea.vmem [#allocation2], %s279
          %s282 = ssub.s32 128, 128
          %283 = vsyncadd %s277, %s282
          %s284 = sadd.s32 %s32, %s31
          %s285 = smul.addr %s284, 128
          %s286 = scalar_lea.hbm %s0, %s285
          %s288 = sshll.u32 %s280, 4
          %s289 = int_to_ptr.vmem [resolvable:$true] %s288
          %291 = dma.hbm_to_vmem [thread:$0]  %s286, 128, %s289, %s277
        $region36: #{tpu_custom_call.1} parent=31 // pred_fallthru
          _
      $region32: #{tpu_custom_call.1} parent=5 // pred_fallthru
        _
      %p292 = scmp.le.s32.totalorder 1, %s24
      %p293 = scmp.lt.s32.totalorder %s24, 3
      %p294 = pnand %p292, %p293
      %p295 = pneg %p294
      // Predicated region
      $region37: #{tpu_custom_call.1} parent=5 // pred_check
        _
      $region38: #{tpu_custom_call.1} parent=5 // pred_check_branch
        %297 = sbr.rel (%p294) target = $region40
      $region39: #{tpu_custom_call.1} parent=5 // pred_region
        %s298 = ssub.s32 %s24, 1
        %s299 = sand.u32 %s51, 1
        %s300 = scalar_lea.sflag [#allocation3], %s299
        %s301 = sand.u32 %s51, 1
        %s302 = smul.addr %s301, 8
        %s303 = scalar_lea.vmem [#allocation2], %s302
        // Predicated region
        $region41: #{tpu_custom_call.1} parent=39 // pred_check
          %p304 = pneg %p64
        $region42: #{tpu_custom_call.1} parent=39 // pred_check_branch
          %306 = sbr.rel (%p304) target = $region44
        $region43: #{tpu_custom_call.1} parent=39 // pred_region
          %307 = dma.done %s300, 128
        $region44: #{tpu_custom_call.1} parent=39 // pred_fallthru
          _
        // Predicated region
        $region45: #{tpu_custom_call.1} parent=39 // pred_check
          %p308 = pneg %p127
        $region46: #{tpu_custom_call.1} parent=39 // pred_check_branch
          %310 = sbr.rel (%p308) target = $region48
        $region47: #{tpu_custom_call.1} parent=39 // pred_region
          %311 = dma.done [#allocation6], 512
        $region48: #{tpu_custom_call.1} parent=39 // pred_fallthru
          _
        %s312 = sand.u32 %s51, 1
        %s313 = scalar_lea.sflag [#allocation3], %s312
        %s314 = sand.u32 %s51, 1
        %s315 = smul.addr %s314, 8
        %s316 = scalar_lea.vmem [#allocation2], %s315
        %p317 = pneg %p64
        %p318 = pneg %p61
        %p319 = pneg %p85
        %p320 = pneg %p82
        %p321 = pneg %p106
        %p322 = pneg %p103
        %p323 = pneg %p127
        %p324 = pneg %p124
        %p325 = pneg %p148
        %p326 = pneg %p145
        %p327 = pneg %p176
        %p328 = pneg %p173
        %s329 = sand.u32 %s163, 1
        %s330 = scalar_lea.sflag [#allocation4], %s329
        %s331 = sand.u32 %s163, 1
        %s332 = smul.addr %s331, 16
        %s333 = scalar_lea.vmem [#allocation7], %s332
        %p334 = pneg %p204
        %p335 = pneg %p201
        %s336 = sand.u32 %s29, 1
        %s337 = scalar_lea.sflag [#allocation9], %s336
        %s338 = sand.u32 %s191, 1
        %s339 = smul.addr %s338, 16
        %s340 = scalar_lea.vmem [#allocation8], %s339
        %p341 = pneg %p232
        %p342 = pneg %p229
        %s343 = sand.u32 %s29, 1
        %s344 = scalar_lea.sflag [#allocation9], %s343
        %s345 = sand.u32 %s219, 1
        %s346 = smul.addr %s345, 16
        %s347 = scalar_lea.vmem [#allocation10], %s346
        %v348 = vld [vmem:[%s303] sm:$0xff]
        %vm349 = vcmask 261120
        %v350 = vsel %vm349, %v348, 0.0
        %351 = vadd.xlane.f32.xlu0 %v350
        %v352 = vpop.xlane.xlu0 %351
        %v353 = vrcp.pop 32.0
        %v354 = vmul.f32 %v352, %v353
        %v355 = vsub.f32 %v348, %v354
        %v356 = vmul.f32 %v355, %v355
        %v357 = vsel %vm349, %v356, 0.0
        %358 = vadd.xlane.f32.xlu0 %v357
        %v359 = vpop.xlane.xlu0 %358
        %v360 = vmul.f32 %v359, %v353
        %v361 = vadd.f32 %v360, 1e-05
        %v362 = vrsqrt.pop %v361
        %v363 = vmul.f32 %v355, %v362
        %v364 = vld [vmem:[%s1] sm:$0x1]
        %v366 = vlaneseq
        %v367 = vshrl.u32 %v366, 7
        %v368 = vsub.s32 0, %v367
        %v369 = vrot.slane %v364, %v368
        %v371 = vmul.f32 %v363, %v369
        %v372 = vld [vmem:[%s2] sm:$0x1]
        %v374 = vlaneseq
        %v375 = vshrl.u32 %v374, 7
        %v376 = vsub.s32 0, %v375
        %v377 = vrot.slane %v372, %v376
        %v379 = vadd.f32 %v371, %v377
        %v380 = vld [vmem:[#allocation5] sm:$0xff]
        %v381 = vld [vmem:[#allocation5 + $0x8] sm:$0xff]
        %v382 = vld [vmem:[#allocation5 + $0x10] sm:$0xff]
        %v383 = vld [vmem:[#allocation5 + $0x18] sm:$0xff]
        %v384 = vld [vmem:[%s4] sm:$0x1]
        %v386 = vlaneseq
        %v387 = vshrl.u32 %v386, 7
        %v388 = vsub.s32 0, %v387
        %v389 = vrot.slane %v384, %v388
        %v392 = vsel %vm349, %v379, 0
        %394 = vmatprep.subr.mxu0 0.0
        %395 = vmatpush1.msra.mxu0 %v380
        %396 = vmatprep.subr.mxu0 0.0
        %397 = vmatpush1.msra.mxu0 %v381
        %398 = vmatprep.subr.mxu0 0.0
        %399 = vmatpush1.msra.mxu0 %v382
        %400 = vmatprep.subr.mxu0 0.0
        %401 = vmatpush1.msra.mxu0 %v383
        %402 = vmatprep.subr.mxu0 0.0
        %403 = vmatpush1.msra.mxu0 0.0
        %404 = vmatprep.subr.mxu0 0.0
        %405 = vmatpush1.msra.mxu0 0.0
        %406 = vmatprep.subr.mxu0 0.0
        %407 = vmatpush1.msra.mxu0 0.0
        %408 = vmatprep.subr.mxu0 0.0
        %409 = vmatpush1.msra.mxu0 0.0
        %410 = vmatprep.subr.mxu0 0.0
        %411 = vmatpush1.msra.mxu0 0.0
        %412 = vmatprep.subr.mxu0 0.0
        %413 = vmatpush1.msra.mxu0 0.0
        %414 = vmatprep.subr.mxu0 0.0
        %415 = vmatpush1.msra.mxu0 0.0
        %416 = vmatprep.subr.mxu0 0.0
        %417 = vmatpush1.msra.mxu0 0.0
        %418 = vmatprep.subr.mxu0 0.0
        %419 = vmatpush1.msra.mxu0 0.0
        %420 = vmatprep.subr.mxu0 0.0
        %421 = vmatpush1.msra.mxu0 0.0
        %422 = vmatprep.subr.mxu0 0.0
        %423 = vmatpush1.msra.mxu0 0.0
        %424 = vmatprep.subr.mxu0 0.0
        %425 = vmatpush1.msra.mxu0 0.0
        %426 = vmatprep.subr.mxu0 0.0
        %427 = vmatpush1.msra.mxu0 0.0
        %428 = vmatprep.subr.mxu0 0.0
        %429 = vmatpush1.msra.mxu0 0.0
        %430 = vmatprep.subr.mxu0 0.0
        %431 = vmatpush1.msra.mxu0 0.0
        %432 = vmatprep.subr.mxu0 0.0
        %433 = vmatpush1.msra.mxu0 0.0
        %434 = vmatprep.subr.mxu0 0.0
        %435 = vmatpush1.msra.mxu0 0.0
        %436 = vmatprep.subr.mxu0 0.0
        %437 = vmatpush1.msra.mxu0 0.0
        %438 = vmatprep.subr.mxu0 0.0
        %439 = vmatpush1.msra.mxu0 0.0
        %440 = vmatprep.subr.mxu0 0.0
        %441 = vmatpush1.msra.mxu0 0.0
        %442 = vmatprep.subr.mxu0 0.0
        %443 = vmatpush1.msra.mxu0 0.0
        %444 = vmatprep.subr.mxu0 0.0
        %445 = vmatpush1.msra.mxu0 0.0
        %446 = vmatprep.subr.mxu0 0.0
        %447 = vmatpush1.msra.mxu0 0.0
        %448 = vmatprep.subr.mxu0 0.0
        %449 = vmatpush1.msra.mxu0 0.0
        %450 = vmatprep.subr.mxu0 0.0
        %451 = vmatpush1.msra.mxu0 0.0
        %452 = vmatprep.subr.mxu0 0.0
        %453 = vmatpush1.msra.mxu0 0.0
        %454 = vmatprep.subr.mxu0 0.0
        %455 = vmatpush1.msra.mxu0 0.0
        %456 = vmatprep.subr.mxu0 0.0
        %457 = vmatpush1.msra.mxu0 0.0
        %458 = vmatprep.mubr.f32.mxu0 0.0
        %459 = vmatmul.mubr.f32.gmra.mrb[0].mxu0 %v392
        %v460 = vpop.f32.mrb[0].mxu0
        %v461 = vadd.f32 %v389, %v460
        %v462 = vpop.f32.mrb[0].mxu0
        %463 = vdwg.mxu0
        %465 = vrot.lane.b32.xlu0 %v461, 112
        %v466 = vpop.permute.xlu0 %465
        %v468 = vcombine.high %v461, 0.0
        %v470 = vunpack.c.l.s4 1983009808
        %v471 = vunpack.c.0.s8 %v470
        %v472 = vlaneseq
        %v473 = vshrl.u32 %v472, 7
        %v474 = vsub.s32 %v471, %v473
        %v475 = vrot.slane %v461, %v474
        %v477 = vunpack.c.l.s4 1983009808
        %v478 = vunpack.c.0.s8 %v477
        %v479 = vlaneseq
        %v480 = vshrl.u32 %v479, 7
        %v481 = vsub.s32 %v478, %v480
        %v482 = vrot.slane %v468, %v481
        %v483 = vcombine.high %v466, 0.0
        %v485 = vunpack.c.l.s4 1983009808
        %v486 = vunpack.c.0.s8 %v485
        %v487 = vlaneseq
        %v488 = vshrl.u32 %v487, 7
        %v489 = vsub.s32 %v486, %v488
        %v490 = vrot.slane %v466, %v489
        %v492 = vunpack.c.l.s4 1983009808
        %v493 = vunpack.c.0.s8 %v492
        %v494 = vlaneseq
        %v495 = vshrl.u32 %v494, 7
        %v496 = vsub.s32 %v493, %v495
        %v497 = vrot.slane %v483, %v496
        %v498 = vcombine.low %v475, %v490
        %v499 = vcombine.high %v475, %v490
        %v501 = vunpack.c.l.s4 1934713408
        %v502 = vunpack.c.0.s8 %v501
        %v503 = vlaneseq
        %v504 = vshrl.u32 %v503, 7
        %v505 = vsub.s32 %v502, %v504
        %v506 = vrot.slane %v498, %v505
        %v508 = vunpack.c.l.s4 1934713408
        %v509 = vunpack.c.0.s8 %v508
        %v510 = vlaneseq
        %v511 = vshrl.u32 %v510, 7
        %v512 = vsub.s32 %v509, %v511
        %v513 = vrot.slane %v499, %v512
        %v514 = vcombine.low %v482, %v497
        %v515 = vcombine.high %v482, %v497
        %v517 = vunpack.c.l.s4 1934713408
        %v518 = vunpack.c.0.s8 %v517
        %v519 = vlaneseq
        %v520 = vshrl.u32 %v519, 7
        %v521 = vsub.s32 %v518, %v520
        %v522 = vrot.slane %v514, %v521
        %v524 = vunpack.c.l.s4 1934713408
        %v525 = vunpack.c.0.s8 %v524
        %v526 = vlaneseq
        %v527 = vshrl.u32 %v526, 7
        %v528 = vsub.s32 %v525, %v527
        %v529 = vrot.slane %v515, %v528
        %v530 = vcombine.high %v506, 0.0
        %v531 = vcombine.high %v513, 0.0
        %v532 = vcombine.high %v522, 0.0
        %v533 = vcombine.high %v529, 0.0
        %v534 = vcombine.low %v506, %v513
        %v536 = vunpack.c.l.s4 1983009808
        %v537 = vunpack.c.0.s8 %v536
        %v538 = vlaneseq
        %v539 = vshrl.u32 %v538, 7
        %v540 = vsub.s32 %v537, %v539
        %v541 = vrot.slane %v534, %v540
        %v542 = vcombine.low %v530, %v531
        %v544 = vunpack.c.l.s4 1983009808
        %v545 = vunpack.c.0.s8 %v544
        %v546 = vlaneseq
        %v547 = vshrl.u32 %v546, 7
        %v548 = vsub.s32 %v545, %v547
        %v549 = vrot.slane %v542, %v548
        %v550 = vcombine.low %v522, %v529
        %v552 = vunpack.c.l.s4 1983009808
        %v553 = vunpack.c.0.s8 %v552
        %v554 = vlaneseq
        %v555 = vshrl.u32 %v554, 7
        %v556 = vsub.s32 %v553, %v555
        %v557 = vrot.slane %v550, %v556
        %v558 = vcombine.low %v532, %v533
        %v560 = vunpack.c.l.s4 1983009808
        %v561 = vunpack.c.0.s8 %v560
        %v562 = vlaneseq
        %v563 = vshrl.u32 %v562, 7
        %v564 = vsub.s32 %v561, %v563
        %v565 = vrot.slane %v558, %v564
        %v566 = vcombine.low %v541, %v549
        %v568 = vunpack.c.l.s4 1934713408
        %v569 = vunpack.c.0.s8 %v568
        %v570 = vlaneseq
        %v571 = vshrl.u32 %v570, 7
        %v572 = vsub.s32 %v569, %v571
        %v573 = vrot.slane %v566, %v572
        %v574 = vcombine.low %v557, %v565
        %v576 = vunpack.c.l.s4 1934713408
        %v577 = vunpack.c.0.s8 %v576
        %v578 = vlaneseq
        %v579 = vshrl.u32 %v578, 7
        %v580 = vsub.s32 %v577, %v579
        %v581 = vrot.slane %v574, %v580
        %v582 = vcombine.low %v573, %v581
        %v583 = vcombine.high %v573, %v581
        %vm584 = vcmask 130048
        %585 = vst.msk [vmem:[%s333] sm:$0xff] %vm584, %v582
        %586 = vst.msk [vmem:[%s333 + $0x8] sm:$0xff] %vm584, %v583
        %587 = vrot.lane.b32.xlu0 %v461, 96
        %v588 = vpop.permute.xlu0 %587
        %589 = vrot.lane.b32.xlu0 %v466, 96
        %v590 = vpop.permute.xlu0 %589
        %v593 = vcombine.high %v588, 0.0
        %v595 = vunpack.c.l.s4 1983009808
        %v596 = vunpack.c.0.s8 %v595
        %v597 = vlaneseq
        %v598 = vshrl.u32 %v597, 7
        %v599 = vsub.s32 %v596, %v598
        %v600 = vrot.slane %v588, %v599
        %v602 = vunpack.c.l.s4 1983009808
        %v603 = vunpack.c.0.s8 %v602
        %v604 = vlaneseq
        %v605 = vshrl.u32 %v604, 7
        %v606 = vsub.s32 %v603, %v605
        %v607 = vrot.slane %v593, %v606
        %v608 = vcombine.high %v590, 0.0
        %v610 = vunpack.c.l.s4 1983009808
        %v611 = vunpack.c.0.s8 %v610
        %v612 = vlaneseq
        %v613 = vshrl.u32 %v612, 7
        %v614 = vsub.s32 %v611, %v613
        %v615 = vrot.slane %v590, %v614
        %v617 = vunpack.c.l.s4 1983009808
        %v618 = vunpack.c.0.s8 %v617
        %v619 = vlaneseq
        %v620 = vshrl.u32 %v619, 7
        %v621 = vsub.s32 %v618, %v620
        %v622 = vrot.slane %v608, %v621
        %v623 = vcombine.low %v600, %v615
        %v624 = vcombine.high %v600, %v615
        %v626 = vunpack.c.l.s4 1934713408
        %v627 = vunpack.c.0.s8 %v626
        %v628 = vlaneseq
        %v629 = vshrl.u32 %v628, 7
        %v630 = vsub.s32 %v627, %v629
        %v631 = vrot.slane %v623, %v630
        %v633 = vunpack.c.l.s4 1934713408
        %v634 = vunpack.c.0.s8 %v633
        %v635 = vlaneseq
        %v636 = vshrl.u32 %v635, 7
        %v637 = vsub.s32 %v634, %v636
        %v638 = vrot.slane %v624, %v637
        %v639 = vcombine.low %v607, %v622
        %v640 = vcombine.high %v607, %v622
        %v642 = vunpack.c.l.s4 1934713408
        %v643 = vunpack.c.0.s8 %v642
        %v644 = vlaneseq
        %v645 = vshrl.u32 %v644, 7
        %v646 = vsub.s32 %v643, %v645
        %v647 = vrot.slane %v639, %v646
        %v649 = vunpack.c.l.s4 1934713408
        %v650 = vunpack.c.0.s8 %v649
        %v651 = vlaneseq
        %v652 = vshrl.u32 %v651, 7
        %v653 = vsub.s32 %v650, %v652
        %v654 = vrot.slane %v640, %v653
        %v655 = vcombine.high %v631, 0.0
        %v656 = vcombine.high %v638, 0.0
        %v657 = vcombine.high %v647, 0.0
        %v658 = vcombine.high %v654, 0.0
        %v659 = vcombine.low %v631, %v638
        %v661 = vunpack.c.l.s4 1983009808
        %v662 = vunpack.c.0.s8 %v661
        %v663 = vlaneseq
        %v664 = vshrl.u32 %v663, 7
        %v665 = vsub.s32 %v662, %v664
        %v666 = vrot.slane %v659, %v665
        %v667 = vcombine.low %v655, %v656
        %v669 = vunpack.c.l.s4 1983009808
        %v670 = vunpack.c.0.s8 %v669
        %v671 = vlaneseq
        %v672 = vshrl.u32 %v671, 7
        %v673 = vsub.s32 %v670, %v672
        %v674 = vrot.slane %v667, %v673
        %v675 = vcombine.low %v647, %v654
        %v677 = vunpack.c.l.s4 1983009808
        %v678 = vunpack.c.0.s8 %v677
        %v679 = vlaneseq
        %v680 = vshrl.u32 %v679, 7
        %v681 = vsub.s32 %v678, %v680
        %v682 = vrot.slane %v675, %v681
        %v683 = vcombine.low %v657, %v658
        %v685 = vunpack.c.l.s4 1983009808
        %v686 = vunpack.c.0.s8 %v685
        %v687 = vlaneseq
        %v688 = vshrl.u32 %v687, 7
        %v689 = vsub.s32 %v686, %v688
        %v690 = vrot.slane %v683, %v689
        %v691 = vcombine.low %v666, %v674
        %v693 = vunpack.c.l.s4 1934713408
        %v694 = vunpack.c.0.s8 %v693
        %v695 = vlaneseq
        %v696 = vshrl.u32 %v695, 7
        %v697 = vsub.s32 %v694, %v696
        %v698 = vrot.slane %v691, %v697
        %v699 = vcombine.low %v682, %v690
        %v701 = vunpack.c.l.s4 1934713408
        %v702 = vunpack.c.0.s8 %v701
        %v703 = vlaneseq
        %v704 = vshrl.u32 %v703, 7
        %v705 = vsub.s32 %v702, %v704
        %v706 = vrot.slane %v699, %v705
        %v707 = vcombine.low %v698, %v706
        %v708 = vcombine.high %v698, %v706
        %709 = vst.msk [vmem:[%s340] sm:$0xff] %vm584, %v707
        %710 = vst.msk [vmem:[%s340 + $0x8] sm:$0xff] %vm584, %v708
        %711 = vrot.lane.b32.xlu0 %v461, 64
        %v712 = vpop.permute.xlu0 %711
        %713 = vrot.lane.b32.xlu0 %v466, 64
        %v714 = vpop.permute.xlu0 %713
        %v717 = vcombine.high %v712, 0.0
        %v719 = vunpack.c.l.s4 1983009808
        %v720 = vunpack.c.0.s8 %v719
        %v721 = vlaneseq
        %v722 = vshrl.u32 %v721, 7
        %v723 = vsub.s32 %v720, %v722
        %v724 = vrot.slane %v712, %v723
        %v726 = vunpack.c.l.s4 1983009808
        %v727 = vunpack.c.0.s8 %v726
        %v728 = vlaneseq
        %v729 = vshrl.u32 %v728, 7
        %v730 = vsub.s32 %v727, %v729
        %v731 = vrot.slane %v717, %v730
        %v732 = vcombine.high %v714, 0.0
        %v734 = vunpack.c.l.s4 1983009808
        %v735 = vunpack.c.0.s8 %v734
        %v736 = vlaneseq
        %v737 = vshrl.u32 %v736, 7
        %v738 = vsub.s32 %v735, %v737
        %v739 = vrot.slane %v714, %v738
        %v741 = vunpack.c.l.s4 1983009808
        %v742 = vunpack.c.0.s8 %v741
        %v743 = vlaneseq
        %v744 = vshrl.u32 %v743, 7
        %v745 = vsub.s32 %v742, %v744
        %v746 = vrot.slane %v732, %v745
        %v747 = vcombine.low %v724, %v739
        %v748 = vcombine.high %v724, %v739
        %v750 = vunpack.c.l.s4 1934713408
        %v751 = vunpack.c.0.s8 %v750
        %v752 = vlaneseq
        %v753 = vshrl.u32 %v752, 7
        %v754 = vsub.s32 %v751, %v753
        %v755 = vrot.slane %v747, %v754
        %v757 = vunpack.c.l.s4 1934713408
        %v758 = vunpack.c.0.s8 %v757
        %v759 = vlaneseq
        %v760 = vshrl.u32 %v759, 7
        %v761 = vsub.s32 %v758, %v760
        %v762 = vrot.slane %v748, %v761
        %v763 = vcombine.low %v731, %v746
        %v764 = vcombine.high %v731, %v746
        %v766 = vunpack.c.l.s4 1934713408
        %v767 = vunpack.c.0.s8 %v766
        %v768 = vlaneseq
        %v769 = vshrl.u32 %v768, 7
        %v770 = vsub.s32 %v767, %v769
        %v771 = vrot.slane %v763, %v770
        %v773 = vunpack.c.l.s4 1934713408
        %v774 = vunpack.c.0.s8 %v773
        %v775 = vlaneseq
        %v776 = vshrl.u32 %v775, 7
        %v777 = vsub.s32 %v774, %v776
        %v778 = vrot.slane %v764, %v777
        %v779 = vcombine.high %v755, 0.0
        %v780 = vcombine.high %v762, 0.0
        %v781 = vcombine.high %v771, 0.0
        %v782 = vcombine.high %v778, 0.0
        %v783 = vcombine.low %v755, %v762
        %v785 = vunpack.c.l.s4 1983009808
        %v786 = vunpack.c.0.s8 %v785
        %v787 = vlaneseq
        %v788 = vshrl.u32 %v787, 7
        %v789 = vsub.s32 %v786, %v788
        %v790 = vrot.slane %v783, %v789
        %v791 = vcombine.low %v779, %v780
        %v793 = vunpack.c.l.s4 1983009808
        %v794 = vunpack.c.0.s8 %v793
        %v795 = vlaneseq
        %v796 = vshrl.u32 %v795, 7
        %v797 = vsub.s32 %v794, %v796
        %v798 = vrot.slane %v791, %v797
        %v799 = vcombine.low %v771, %v778
        %v801 = vunpack.c.l.s4 1983009808
        %v802 = vunpack.c.0.s8 %v801
        %v803 = vlaneseq
        %v804 = vshrl.u32 %v803, 7
        %v805 = vsub.s32 %v802, %v804
        %v806 = vrot.slane %v799, %v805
        %v807 = vcombine.low %v781, %v782
        %v809 = vunpack.c.l.s4 1983009808
        %v810 = vunpack.c.0.s8 %v809
        %v811 = vlaneseq
        %v812 = vshrl.u32 %v811, 7
        %v813 = vsub.s32 %v810, %v812
        %v814 = vrot.slane %v807, %v813
        %v815 = vcombine.low %v790, %v798
        %v817 = vunpack.c.l.s4 1934713408
        %v818 = vunpack.c.0.s8 %v817
        %v819 = vlaneseq
        %v820 = vshrl.u32 %v819, 7
        %v821 = vsub.s32 %v818, %v820
        %v822 = vrot.slane %v815, %v821
        %v823 = vcombine.low %v806, %v814
        %v825 = vunpack.c.l.s4 1934713408
        %v826 = vunpack.c.0.s8 %v825
        %v827 = vlaneseq
        %v828 = vshrl.u32 %v827, 7
        %v829 = vsub.s32 %v826, %v828
        %v830 = vrot.slane %v823, %v829
        %v831 = vcombine.low %v822, %v830
        %v832 = vcombine.high %v822, %v830
        %833 = vst.msk [vmem:[%s347] sm:$0xff] %vm584, %v831
        %834 = vst.msk [vmem:[%s347 + $0x8] sm:$0xff] %vm584, %v832
        %s835 = sand.u32 %s163, 1
        %s836 = scalar_lea.sflag [#allocation4], %s835
        %s837 = sand.u32 %s163, 1
        %s838 = smul.addr %s837, 16
        %s839 = scalar_lea.vmem [#allocation7], %s838
        %s840 = sand.u32 %s29, 1
        %s841 = scalar_lea.sflag [#allocation9], %s840
        %s842 = sand.u32 %s191, 1
        %s843 = smul.addr %s842, 16
        %s844 = scalar_lea.vmem [#allocation8], %s843
        %s845 = sand.u32 %s29, 1
        %s846 = scalar_lea.sflag [#allocation9], %s845
        %s847 = sand.u32 %s219, 1
        %s848 = smul.addr %s847, 16
        %s849 = scalar_lea.vmem [#allocation10], %s848
        // Predicated region
        $region49: #{tpu_custom_call.1} parent=39 // pred_check
          %p850 = pneg %p173
        $region50: #{tpu_custom_call.1} parent=39 // pred_check_branch
          %852 = sbr.rel (%p850) target = $region52
        $region51: #{tpu_custom_call.1} parent=39 // pred_region
          %s854 = ssub.s32 256, 256
          %855 = vsyncadd %s836, %s854
          %s856 = smul.addr %s33, 2
          %s857 = sadd.s32 %s34, %s856
          %s858 = smul.addr %s857, 128
          %s859 = scalar_lea.hbm %s5, %s858
          %s860 = sshll.u32 %s839, 4
          %s861 = int_to_ptr.vmem [resolvable:$true] %s860
          %866 = dma.vmem_to_hbm [thread:$0]  %s861, 256, %s859, %s836, 128, 128, 8
        $region52: #{tpu_custom_call.1} parent=39 // pred_fallthru
          _
        // Predicated region
        $region53: #{tpu_custom_call.1} parent=39 // pred_check
          %p867 = pneg %p201
        $region54: #{tpu_custom_call.1} parent=39 // pred_check_branch
          %869 = sbr.rel (%p867) target = $region56
        $region55: #{tpu_custom_call.1} parent=39 // pred_region
          %s871 = ssub.s32 256, 256
          %872 = vsyncadd %s841, %s871
          %s873 = smul.addr %s33, 2
          %s874 = sadd.s32 %s34, %s873
          %s875 = smul.addr %s874, 128
          %s876 = scalar_lea.hbm %s6, %s875
          %s877 = sshll.u32 %s844, 4
          %s878 = int_to_ptr.vmem [resolvable:$true] %s877
          %883 = dma.vmem_to_hbm [thread:$0]  %s878, 256, %s876, %s841, 128, 128, 8
        $region56: #{tpu_custom_call.1} parent=39 // pred_fallthru
          _
        // Predicated region
        $region57: #{tpu_custom_call.1} parent=39 // pred_check
          %p884 = pneg %p229
        $region58: #{tpu_custom_call.1} parent=39 // pred_check_branch
          %886 = sbr.rel (%p884) target = $region60
        $region59: #{tpu_custom_call.1} parent=39 // pred_region
          %s888 = ssub.s32 256, 256
          %889 = vsyncadd %s846, %s888
          %s890 = smul.addr %s33, 2
          %s891 = sadd.s32 %s34, %s890
          %s892 = smul.addr %s891, 128
          %s893 = scalar_lea.hbm %s7, %s892
          %s894 = sshll.u32 %s849, 4
          %s895 = int_to_ptr.vmem [resolvable:$true] %s894
          %900 = dma.vmem_to_hbm [thread:$0]  %s895, 256, %s893, %s846, 128, 128, 8
        $region60: #{tpu_custom_call.1} parent=39 // pred_fallthru
          _
      $region40: #{tpu_custom_call.1} parent=5 // pred_fallthru
        _
      %p901 = scmp.le.s32.totalorder 2, %s24
      // Predicated region
      $region61: #{tpu_custom_call.1} parent=5 // pred_check
        %p902 = pneg %p901
      $region62: #{tpu_custom_call.1} parent=5 // pred_check_branch
        %904 = sbr.rel (%p902) target = $region64
      $region63: #{tpu_custom_call.1} parent=5 // pred_region
        %s905 = ssub.s32 %s24, 2
        // Predicated region
        $region65: #{tpu_custom_call.1} parent=63 // pred_check
          %p906 = pneg %p179
        $region66: #{tpu_custom_call.1} parent=63 // pred_check_branch
          %908 = sbr.rel (%p906) target = $region68
        $region67: #{tpu_custom_call.1} parent=63 // pred_region
          %s909 = sand.u32 %s164, 1
          %s910 = scalar_lea.sflag [#allocation4], %s909
          %s911 = sand.u32 %s164, 1
          %s912 = smul.addr %s911, 16
          %s913 = scalar_lea.vmem [#allocation7], %s912
          %914 = dma.done %s910, 256
        $region68: #{tpu_custom_call.1} parent=63 // pred_fallthru
          _
        // Predicated region
        $region69: #{tpu_custom_call.1} parent=63 // pred_check
          %p915 = pneg %p207
        $region70: #{tpu_custom_call.1} parent=63 // pred_check_branch
          %917 = sbr.rel (%p915) target = $region72
        $region71: #{tpu_custom_call.1} parent=63 // pred_region
          %s918 = sand.u32 %s30, 1
          %s919 = scalar_lea.sflag [#allocation9], %s918
          %s920 = sand.u32 %s192, 1
          %s921 = smul.addr %s920, 16
          %s922 = scalar_lea.vmem [#allocation8], %s921
          %923 = dma.done %s919, 256
        $region72: #{tpu_custom_call.1} parent=63 // pred_fallthru
          _
        // Predicated region
        $region73: #{tpu_custom_call.1} parent=63 // pred_check
          %p924 = pneg %p235
        $region74: #{tpu_custom_call.1} parent=63 // pred_check_branch
          %926 = sbr.rel (%p924) target = $region76
        $region75: #{tpu_custom_call.1} parent=63 // pred_region
          %s927 = sand.u32 %s30, 1
          %s928 = scalar_lea.sflag [#allocation9], %s927
          %s929 = sand.u32 %s220, 1
          %s930 = smul.addr %s929, 16
          %s931 = scalar_lea.vmem [#allocation10], %s930
          %932 = dma.done %s928, 256
        $region76: #{tpu_custom_call.1} parent=63 // pred_fallthru
          _
      $region64: #{tpu_custom_call.1} parent=5 // pred_fallthru
        _
    $region6: #{tpu_custom_call.1} parent=1 // loop_footer
      %s28 = sadd.s32 1, %s24
    $region7: #{tpu_custom_call.1} parent=1 // loop_footer_branch
      %23 = sbr.rel target = $region3
    $region8: #{tpu_custom_call.1} parent=1 // loop_exit
      _
    %933 = vsyncpa [#allocation3], 1
    %s934 = scalar_lea.sflag [#allocation3], 1
    %935 = vsyncpa %s934, 1
    %936 = vsyncpa [#allocation6], 1
    %937 = vsyncpa [#allocation4], 1
    %s938 = scalar_lea.sflag [#allocation4], 1
    %939 = vsyncpa %s938, 1
    %940 = vsyncpa [#allocation9], 1
    %s941 = scalar_lea.sflag [#allocation9], 1
    %942 = vsyncpa %s941, 1

</llo_original>
